<compile_context>
chip_gen: v7x
topology: tpu7x:2x2x1
jax: 0.10.0
libtpu: 0.0.40
codegen_flags: <defaults>
</compile_context>

<pallas_src>
import functools

import jax
import jax.numpy as jnp
from jax.experimental import pallas as pl
from jax.experimental.pallas import tpu as pltpu

LANE = 128     # TPU lane width (last dim)
SUBLANE = 8    # TPU sublane width (second-to-last dim)


def _round_up(x, m):
    return (x + m - 1) // m * m


# ----------------------------------------------------------------------------
# Irreps parsing / e3nn weight construction (plain-JAX glue)
# ----------------------------------------------------------------------------
def parse_irreps(irreps_str):
    """Parse 'MULxLp + ...' into a list of (mul, l, parity)."""
    out = []
    for tok in irreps_str.split("+"):
        tok = tok.strip()
        mul_s, ir_s = tok.split("x")
        out.append((int(mul_s), int(ir_s[:-1]), ir_s[-1]))
    return out


def irreps_dim(irreps):
    return sum(mul * (2 * l + 1) for mul, l, _ in irreps)


def build_e3nn_linear_weight(key, irreps_in_str, irreps_out_str):
    """Dense (dim_in, dim_out) block-diagonal matrix reproducing e3nn o3.Linear
    with default settings (internal/shared weights, no bias,
    path_normalization='element'; weights ~ N(0,1))."""
    irreps_in = parse_irreps(irreps_in_str)
    irreps_out = parse_irreps(irreps_out_str)
    dim_in = irreps_dim(irreps_in)
    dim_out = irreps_dim(irreps_out)

    in_offs, off = [], 0
    for mul, l, p in irreps_in:
        in_offs.append(off)
        off += mul * (2 * l + 1)
    out_offs, off = [], 0
    for mul, l, p in irreps_out:
        out_offs.append(off)
        off += mul * (2 * l + 1)

    W = jnp.zeros((dim_in, dim_out), dtype=jnp.float32)
    for oi, (mul_out, l_out, p_out) in enumerate(irreps_out):
        d = 2 * l_out + 1
        fan_in = sum(m for m, l, p in irreps_in if (l, p) == (l_out, p_out))
        if fan_in == 0:
            continue
        alpha = 1.0 / jnp.sqrt(jnp.float32(fan_in))
        for ii, (mul_in, l_in, p_in) in enumerate(irreps_in):
            if (l_in, p_in) != (l_out, p_out):
                continue
            key, sub = jax.random.split(key)
            w = jax.random.normal(sub, (mul_in, mul_out), dtype=jnp.float32)
            block = jnp.kron(w, jnp.eye(d, dtype=jnp.float32)) * alpha
            W = W.at[in_offs[ii]: in_offs[ii] + mul_in * d,
                     out_offs[oi]: out_offs[oi] + mul_out * d].set(block)
    return W


# ----------------------------------------------------------------------------
# Pallas kernel: node-tiled matmul + optional activation + fused hash dropout
# ----------------------------------------------------------------------------
def _fmix32(h):
    """murmur3 finalizer: good avalanche for consecutive integer indices."""
    h = h ^ (h >> 16)
    h = h * jnp.uint32(0x85EBCA6B)
    h = h ^ (h >> 13)
    h = h * jnp.uint32(0xC2B2AE35)
    h = h ^ (h >> 16)
    return h


def _linear_kernel(seed_ref, x_ref, w_ref, o_ref, *,
                   activation, dropout_rate, train, compute_dtype):
    x = x_ref[...]
    w = w_ref[...]
    if compute_dtype is not None and x.dtype != compute_dtype:
        # in-kernel cast: near-free VPU op, avoids a separate HBM pass over x
        x = x.astype(compute_dtype)
    y = jnp.dot(x, w, preferred_element_type=jnp.float32)

    if activation in ("silu", "swish"):
        y = y * jax.nn.sigmoid(y)
    elif activation == "relu":
        y = jnp.maximum(y, 0.0)
    elif activation == "sigmoid":
        y = jax.nn.sigmoid(y)
    elif activation == "tanh":
        y = jnp.tanh(y)
    elif activation is not None:
        raise ValueError(f"unsupported activation: {activation}")

    if train and dropout_rate > 0.0:
        # nn.Dropout semantics: keep w.p. (1-p), scale kept values by 1/(1-p).
        # Stateless counter-based hash of (seed, global element index): portable
        # (CPU interpret + Mosaic), fused (no extra HBM pass), and decorrelated
        # across node tiles.  NOTE: reusing the same `seed` across calls/layers
        # repeats the mask - thread a fresh seed per call in training loops.
        rows = jax.lax.broadcasted_iota(jnp.int32, y.shape, 0).astype(jnp.uint32)
        cols = jax.lax.broadcasted_iota(jnp.int32, y.shape, 1).astype(jnp.uint32)
        grow = pl.program_id(0).astype(jnp.uint32) * jnp.uint32(y.shape[0]) + rows
        idx = grow * jnp.uint32(y.shape[1]) + cols
        seed = seed_ref[0].astype(jnp.uint32) * jnp.uint32(0x9E3779B9)
        h = _fmix32(idx ^ seed)
        # 24-bit uniform vs threshold (not bit-identical to torch.nn.Dropout RNG)
        thresh = jnp.uint32(int(round(dropout_rate * float(1 << 24))))
        keep = (h >> 8) >= thresh
        y = jnp.where(keep, y * jnp.float32(1.0 / (1.0 - dropout_rate)),
                      jnp.float32(0.0))

    o_ref[...] = y.astype(o_ref.dtype)


# ----------------------------------------------------------------------------
# VMEM budgeting / tile selection (generation-aware)
# ----------------------------------------------------------------------------
def _vmem_budget_bytes():
    cap = None
    try:
        cap = int(pltpu.get_tpu_info().vmem_capacity_bytes)
    except Exception:
        cap = None
    if not cap or cap <= 0:
        cap = 64 << 20          # conservative default: v7x has 64 MiB per TC
    budget = int(cap * 0.60)    # tile-picker budget
    limit_cap = int(cap * 0.80)  # vmem_limit_bytes cap (headroom for Mosaic scratch)
    return budget, limit_cap


def _pick_tile_n(n, dim_in, dim_out_pad, tile_n, comp_item, out_item, budget):
    tile = min(_round_up(max(n, 1), SUBLANE), _round_up(tile_n, SUBLANE))

    def est(t):
        x_bytes = 2 * t * dim_in * comp_item            # double-buffered x tile
        o_bytes = 2 * t * dim_out_pad * out_item        # double-buffered out tile
        w_bytes = dim_in * dim_out_pad * comp_item      # single-buffered resident W
        tmp_bytes = 2 * t * dim_out_pad * 4             # f32 acc + dropout/act temps
        return x_bytes + o_bytes + w_bytes + tmp_bytes

    while tile > SUBLANE and est(tile) > budget:
        tile = _round_up(tile // 2, SUBLANE)
    tile = max(tile, SUBLANE)
    return tile, est(tile)


# ----------------------------------------------------------------------------
# Forward wrapper
# ----------------------------------------------------------------------------
def irreps_linear_forward(x, W, dim_out, activation=None, dropout=0.0,
                          train=False, seed=0, tile_n=512,
                          compute_dtype=None, out_dtype=None):
    """x: (N, dim_in) node features.
    W: (dim_in, dim_out_pad) weight; only the output dim is padded (to a
    multiple of 128) and the padded columns are exactly zero."""
    N, dim_in = x.shape
    w_din, dim_out_pad = W.shape
    assert w_din == dim_in, (w_din, dim_in)
    out_dtype = x.dtype if out_dtype is None else out_dtype

    if compute_dtype is not None and W.dtype != compute_dtype:
        W = W.astype(compute_dtype)   # weight is a parameter; cast once
    comp_item = jnp.dtype(compute_dtype if compute_dtype is not None
                          else x.dtype).itemsize
    out_item = jnp.dtype(out_dtype).itemsize

    budget, limit_cap = _vmem_budget_bytes()
    tile, vmem_est = _pick_tile_n(N, dim_in, dim_out_pad, tile_n,
                                  comp_item, out_item, budget)
    grid = (pl.cdiv(N, tile),)   # ragged N handled by Pallas; no pad pass over x

    vmem_limit = int(vmem_est * 1.25) + (4 << 20)
    vmem_limit = max(32 << 20, min(vmem_limit, limit_cap))

    seed_arr = jnp.asarray([seed], dtype=jnp.int32)
    kernel = functools.partial(_linear_kernel, activation=activation,
                               dropout_rate=float(dropout), train=bool(train),
                               compute_dtype=compute_dtype)

    def _call(single_buffer_w):
        if single_buffer_w and hasattr(pl, "Buffered"):
            # resident W: constant block index -> DMA'd once; single buffer
            # halves its VMEM footprint.
            w_spec = pl.BlockSpec((dim_in, dim_out_pad), lambda i: (0, 0),
                                  pipeline_mode=pl.Buffered(1))
        else:
            w_spec = pl.BlockSpec((dim_in, dim_out_pad), lambda i: (0, 0))
        return pl.pallas_call(
            kernel,
            out_shape=jax.ShapeDtypeStruct((N, dim_out_pad), out_dtype),
            grid_spec=pl.GridSpec(
                grid=grid,
                in_specs=[
                    pl.BlockSpec(memory_space=pltpu.MemorySpace.SMEM),   # seed
                    pl.BlockSpec((tile, dim_in), lambda i: (i, 0)),       # x tile
                    w_spec,                                               # W
                ],
                out_specs=pl.BlockSpec((tile, dim_out_pad), lambda i: (i, 0)),
            ),
            compiler_params=pltpu.CompilerParams(
                dimension_semantics=("parallel",),
                vmem_limit_bytes=vmem_limit,
            ),
        )(seed_arr, x, W)

    try:
        y_pad = _call(True)
    except Exception:
        # pl.Buffered(1) unsupported on this jax version / backend:
        # fall back to default double-buffered weight.
        y_pad = _call(False)

    # slice off lane padding (padded W columns are exactly zero)
    return y_pad[:, :dim_out] if dim_out_pad != dim_out else y_pad


# ----------------------------------------------------------------------------
# Module wrapper mirroring IrrepsDropoutLinear
# ----------------------------------------------------------------------------
class IrrepsDropoutLinear:
    def __init__(self, irreps_in, irreps_out, data_key_in, key,
                 data_key_out=None, activation=None, dropout=0.0,
                 compute_dtype=None, out_dtype=None):
        self.key_input = data_key_in
        self.key_output = data_key_in if data_key_out is None else data_key_out
        self.activation = activation
        self.dropout = float(dropout)
        self.compute_dtype = compute_dtype
        self.out_dtype = out_dtype
        self.W = build_e3nn_linear_weight(key, irreps_in, irreps_out)
        self.dim_in, self.dim_out = self.W.shape
        dop = _round_up(self.dim_out, LANE)
        # lane-dense (multiple-of-128) output columns -> unmasked stores;
        # the padded columns stay exactly zero and are sliced off post-call.
        W_k = jnp.pad(self.W, ((0, 0), (0, dop - self.dim_out)))
        if compute_dtype is not None:
            W_k = W_k.astype(compute_dtype)
        self.W_kernel = W_k

    def __call__(self, data, train=False, seed=0):
        x = data[self.key_input]
        data[self.key_output] = irreps_linear_forward(
            x, self.W_kernel, self.dim_out, activation=self.activation,
            dropout=self.dropout, train=train, seed=seed,
            compute_dtype=self.compute_dtype, out_dtype=self.out_dtype)
        return data


# ----------------------------------------------------------------------------
if __name__ == "__main__":
    key = jax.random.PRNGKey(0)
    k_x, k_w = jax.random.split(key)

    # in = 8x0e + 4x1o + 2x2e (dim 30), out = 16x0e + 8x1o + 4x2e (dim 60)
    irreps_in = "8x0e + 4x1o + 2x2e"
    irreps_out = "16x0e + 8x1o + 4x2e"
    n_nodes = 32

    dim_in = irreps_dim(parse_irreps(irreps_in))
    x = jax.random.normal(k_x, (n_nodes, dim_in), dtype=jnp.float32)

    # --- eval mode, identity activation --------------------------------------
    mod = IrrepsDropoutLinear(irreps_in, irreps_out, data_key_in="node_features",
                              key=k_w, activation=None, dropout=0.0)
    data = {"node_features": x}
    data = mod(data)
    y = data["node_features"]
    jax.block_until_ready(y)
    y_ref = x @ mod.W
    assert y.shape == (n_nodes, mod.dim_out)
    assert jnp.allclose(y, y_ref, atol=1e-4, rtol=1e-4)

    # --- silu activation ------------------------------------------------------
    mod_act = IrrepsDropoutLinear(irreps_in, irreps_out,
                                  data_key_in="node_features",
                                  key=k_w, activation="silu", dropout=0.0)
    y_act = mod_act({"node_features": x})["node_features"]
    jax.block_until_ready(y_act)
    ref_act = y_ref * jax.nn.sigmoid(y_ref)
    assert jnp.allclose(y_act, ref_act, atol=2e-3, rtol=2e-3)

    # --- training-mode fused dropout (elementwise, like nn.Dropout) ----------
    p = 0.3
    mod_do = IrrepsDropoutLinear(irreps_in, irreps_out,
                                 data_key_in="node_features",
                                 key=k_w, activation=None, dropout=p)
    y_do = mod_do({"node_features": x}, train=True, seed=1234)["node_features"]
    jax.block_until_ready(y_do)
    scaled = y_ref / (1.0 - p)
    close_to_zero = jnp.abs(y_do) < 1e-6
    close_to_scaled = jnp.abs(y_do - scaled) < 1e-2
    assert bool(jnp.all(close_to_zero | close_to_scaled))
    drop_frac = float(jnp.mean(close_to_zero))
    assert 0.05 < drop_frac < 0.6, drop_frac

    # --- eval mode must be deterministic / dropout off ------------------------
    y_eval = mod_do({"node_features": x}, train=False)["node_features"]
    jax.block_until_ready(y_eval)
    assert jnp.allclose(y_eval, y_ref, atol=1e-4, rtol=1e-4)

    # --- optional bf16 compute path (mem-bound win; f32 MXU accumulation) ----
    y_bf16 = irreps_linear_forward(x, mod.W_kernel, mod.dim_out,
                                   compute_dtype=jnp.bfloat16)
    jax.block_until_ready(y_bf16)
    assert y_bf16.shape == y_ref.shape
    assert jnp.allclose(y_bf16, y_ref, atol=0.1, rtol=0.1)

    print("KERNEL_OK")
</pallas_src>

<mosaic_0001>
module attributes {stable_mosaic.version = 11 : i64} {
  func.func @_linear_kernel(%arg0: i32, %arg1: memref<1xi32, #tpu.memory_space<smem>>, %arg2: memref<32x30xf32, #tpu.memory_space<vmem>>, %arg3: memref<30x128xf32, #tpu.memory_space<vmem>>, %arg4: memref<32x128xf32, #tpu.memory_space<vmem>>) attributes {dimension_semantics = [#tpu.dimension_semantics<parallel>], iteration_bounds = array<i64: 1>, scalar_prefetch = 0 : i64, scratch_operands = 0 : i64, tpu.core_type = #tpu.core_type<tc>, window_params = [{transform_indices = @transform_0, window_bounds = array<i64: 1>}, {transform_indices = @transform_1, window_bounds = array<i64: 32, 30>}, {pipeline_mode = #tpu.pipeline_mode<synchronous>, transform_indices = @transform_2, window_bounds = array<i64: 30, 128>}, {transform_indices = @transform_3, window_bounds = array<i64: 32, 128>}]} {
    %c0 = arith.constant 0 : index
    %c0_0 = arith.constant 0 : index
    %0 = vector.load %arg2[%c0, %c0_0] : memref<32x30xf32, #tpu.memory_space<vmem>>, vector<32x30xf32>
    %c0_1 = arith.constant 0 : index
    %c0_2 = arith.constant 0 : index
    %1 = vector.load %arg3[%c0_1, %c0_2] : memref<30x128xf32, #tpu.memory_space<vmem>>, vector<30x128xf32>
    %cst = arith.constant dense<0.000000e+00> : vector<32x128xf32>
    %2 = tpu.matmul %0, %1, %cst {dimension_numbers = #tpu.dot_dimension_numbers<[1], [0], [0], [1], [0, 0, 1, 1], [], []>} : vector<32x30xf32>, vector<30x128xf32>, vector<32x128xf32> -> vector<32x128xf32>
    %c0_3 = arith.constant 0 : index
    %c0_4 = arith.constant 0 : index
    %3 = vector.load %arg4[%c0_3, %c0_4] : memref<32x128xf32, #tpu.memory_space<vmem>>, vector<32x128xf32>
    tpu.vector_store %arg4[%c0_3, %c0_4], %2 {strides = array<i32>} : memref<32x128xf32, #tpu.memory_space<vmem>>, vector<32x128xf32>,
    return
  }
  func.func @transform_0(%arg0: i32) -> i32 {
    %c0_i32 = arith.constant 0 : i32
    %c0_i32_0 = arith.constant 0 : i32
    return %c0_i32 : i32
  }
  func.func @transform_1(%arg0: i32) -> (i32, i32) {
    %c0_i32 = arith.constant 0 : i32
    %c0_i32_0 = arith.constant 0 : i32
    return %arg0, %c0_i32 : i32, i32
  }
  func.func @transform_2(%arg0: i32) -> (i32, i32) {
    %c0_i32 = arith.constant 0 : i32
    %c0_i32_0 = arith.constant 0 : i32
    %c0_i32_1 = arith.constant 0 : i32
    return %c0_i32, %c0_i32_0 : i32, i32
  }
  func.func @transform_3(%arg0: i32) -> (i32, i32) {
    %c0_i32 = arith.constant 0 : i32
    %c0_i32_0 = arith.constant 0 : i32
    return %arg0, %c0_i32 : i32, i32
  }
}

module attributes {stable_mosaic.version = 11 : i64} {
  func.func @_linear_kernel(%arg0: i32, %arg1: memref<1xi32, #tpu.memory_space<smem>>, %arg2: memref<32x30xf32, #tpu.memory_space<vmem>>, %arg3: memref<30x128xf32, #tpu.memory_space<vmem>>, %arg4: memref<32x128xf32, #tpu.memory_space<vmem>>) attributes {dimension_semantics = [#tpu.dimension_semantics<parallel>], iteration_bounds = array<i64: 1>, scalar_prefetch = 0 : i64, scratch_operands = 0 : i64, tpu.core_type = #tpu.core_type<tc>, window_params = [{transform_indices = @transform_0, window_bounds = array<i64: 1>}, {transform_indices = @transform_1, window_bounds = array<i64: 32, 30>}, {pipeline_mode = #tpu.pipeline_mode<synchronous>, transform_indices = @transform_2, window_bounds = array<i64: 30, 128>}, {transform_indices = @transform_3, window_bounds = array<i64: 32, 128>}]} {
    %c0 = arith.constant 0 : index
    %c0_0 = arith.constant 0 : index
    %0 = vector.load %arg2[%c0, %c0_0] : memref<32x30xf32, #tpu.memory_space<vmem>>, vector<32x30xf32>
    %c0_1 = arith.constant 0 : index
    %c0_2 = arith.constant 0 : index
    %1 = vector.load %arg3[%c0_1, %c0_2] : memref<30x128xf32, #tpu.memory_space<vmem>>, vector<30x128xf32>
    %cst = arith.constant dense<0.000000e+00> : vector<32x128xf32>
    %2 = tpu.matmul %0, %1, %cst {dimension_numbers = #tpu.dot_dimension_numbers<[1], [0], [0], [1], [0, 0, 1, 1], [], []>} : vector<32x30xf32>, vector<30x128xf32>, vector<32x128xf32> -> vector<32x128xf32>
    %c0_3 = arith.constant 0 : index
    %c0_4 = arith.constant 0 : index
    %3 = vector.load %arg4[%c0_3, %c0_4] : memref<32x128xf32, #tpu.memory_space<vmem>>, vector<32x128xf32>
    tpu.vector_store %arg4[%c0_3, %c0_4], %2 {strides = array<i32>} : memref<32x128xf32, #tpu.memory_space<vmem>>, vector<32x128xf32>,
    return
  }
  func.func @transform_0(%arg0: i32) -> i32 {
    %c0_i32 = arith.constant 0 : i32
    %c0_i32_0 = arith.constant 0 : i32
    return %c0_i32 : i32
  }
  func.func @transform_1(%arg0: i32) -> (i32, i32) {
    %c0_i32 = arith.constant 0 : i32
    %c0_i32_0 = arith.constant 0 : i32
    return %arg0, %c0_i32 : i32, i32
  }
  func.func @transform_2(%arg0: i32) -> (i32, i32) {
    %c0_i32 = arith.constant 0 : i32
    %c0_i32_0 = arith.constant 0 : i32
    %c0_i32_1 = arith.constant 0 : i32
    return %c0_i32, %c0_i32_0 : i32, i32
  }
  func.func @transform_3(%arg0: i32) -> (i32, i32) {
    %c0_i32 = arith.constant 0 : i32
    %c0_i32_0 = arith.constant 0 : i32
    return %arg0, %c0_i32 : i32, i32
  }
}

</mosaic_0001>

<llo_original>
// kernel: tpu_custom_call.1
$region0: #{tpu_custom_call.1}
  #allocation0 [shape = 'u32[]', space=smem, size = 0x4, offset = 0x4, fixed_abs, tag = 'smem constant byte address 0x4 - core index']
  #allocation1 [shape = 'u32[144,128]{1,0:T(1,128)}', space=vmem, size = 0x12000, scoped, tag = 'internal scratch']
  #allocation2 [shape = 's32[1]{0:T(128)S(6)}', space=smem, size = 0x200, scoped, tag = 'scoped memory for tpu_custom_call.1']
  %s0 = inlined_call_operand.<no memory space> [shape: s32[1], index: 0, kind: input, shape index: {}]
  %s1 = inlined_call_operand.hbm [shape: f32[32,30], index: 1, kind: input, shape index: {}]
  %s2 = inlined_call_operand.hbm [shape: f32[30,128], index: 2, kind: input, shape index: {}]
  %s3 = inlined_call_operand.hbm [shape: f32[32,128], index: 3, kind: output, shape index: {}]
  %s4 = sld [smem:[#allocation0]]
  $region30: #{tpu_custom_call.1} parent=0
    _
  %s6 = ssub.s32 1, %s4
  %s7 = scalar_select 0, %s6, %s4
  %8 = sst [smem:[#allocation2]] %s0
  $region1: #{tpu_custom_call.1} parent=0
    #allocation3 [shape = 'u8[16384]{0}', space=vmem, size = 0x4000, scoped, tag = 'input window, operand 1, single buffered']
    #allocation4 [shape = 's32[1]{0}', space=sflag, size = 0x4, scoped, tag = 'scoped memory for tpu_custom_call.1']
    #allocation5 [shape = 's32[1]{0}', space=sflag, size = 0x4, scoped, tag = 'scoped memory for tpu_custom_call.1']
    #allocation6 [shape = 'u8[16384]{0}', space=vmem, size = 0x4000, scoped, tag = 'input window, operand 2, single buffered']
    #allocation7 [shape = 's32[1]{0}', space=sflag, size = 0x4, scoped, tag = 'scoped memory for tpu_custom_call.1']
    #allocation8 [shape = 'u8[16384]{0}', space=vmem, size = 0x4000, scoped, tag = 'output window, operand 0, single buffered']
    %9 = vsyncpa [#allocation4], 0
    %10 = vsyncpa [#allocation7], 0
    %11 = vsyncpa [#allocation5], 0
    // Predicated region
    $region2: #{tpu_custom_call.1} parent=1 // pred_check
      _
    $region3: #{tpu_custom_call.1} parent=1 // pred_check_branch
      %13 = sbr.rel (0) target = $region5
    $region4: #{tpu_custom_call.1} parent=1 // pred_region
      _
    $region5: #{tpu_custom_call.1} parent=1 // pred_fallthru
      _
    // Predicated region
    $region6: #{tpu_custom_call.1} parent=1 // pred_check
      _
    $region7: #{tpu_custom_call.1} parent=1 // pred_check_branch
      %15 = sbr.rel (0) target = $region9
    $region8: #{tpu_custom_call.1} parent=1 // pred_region
      %s17 = ssub.s32 512, 512
      %18 = vsyncadd [#allocation4], %s17
      %s19 = sshll.u32 [#allocation3], 4
      %s20 = int_to_ptr.vmem [resolvable:$true] %s19
      %25 = dma.hbm_to_vmem [thread:$0]  %s1, 512, %s20, [#allocation4], 128, 128, 8
    $region9: #{tpu_custom_call.1} parent=1 // pred_fallthru
      _
    // Predicated region
    $region10: #{tpu_custom_call.1} parent=1 // pred_check
      _
    $region11: #{tpu_custom_call.1} parent=1 // pred_check_branch
      %27 = sbr.rel (0) target = $region13
    $region12: #{tpu_custom_call.1} parent=1 // pred_region
      %s29 = ssub.s32 512, 512
      %30 = vsyncadd [#allocation7], %s29
      %s31 = sshll.u32 [#allocation6], 4
      %s32 = int_to_ptr.vmem [resolvable:$true] %s31
      %37 = dma.hbm_to_vmem [thread:$0]  %s2, 512, %s32, [#allocation7], 128, 128, 8
    $region13: #{tpu_custom_call.1} parent=1 // pred_fallthru
      _
    // Predicated region
    $region14: #{tpu_custom_call.1} parent=1 // pred_check
      _
    $region15: #{tpu_custom_call.1} parent=1 // pred_check_branch
      %39 = sbr.rel (0) target = $region17
    $region16: #{tpu_custom_call.1} parent=1 // pred_region
      %40 = dma.done [#allocation4], 512
    $region17: #{tpu_custom_call.1} parent=1 // pred_fallthru
      _
    // Predicated region
    $region18: #{tpu_custom_call.1} parent=1 // pred_check
      _
    $region19: #{tpu_custom_call.1} parent=1 // pred_check_branch
      %42 = sbr.rel (0) target = $region21
    $region20: #{tpu_custom_call.1} parent=1 // pred_region
      %43 = dma.done [#allocation7], 512
    $region21: #{tpu_custom_call.1} parent=1 // pred_fallthru
      _
    %v44 = vld [vmem:[#allocation3] sm:$0xff]
    %v45 = vld [vmem:[#allocation3 + $0x8] sm:$0xff]
    %v46 = vld [vmem:[#allocation3 + $0x10] sm:$0xff]
    %v47 = vld [vmem:[#allocation3 + $0x18] sm:$0xff]
    %v48 = vld [vmem:[#allocation6] sm:$0xff]
    %v49 = vld [vmem:[#allocation6 + $0x8] sm:$0xff]
    %v50 = vld [vmem:[#allocation6 + $0x10] sm:$0xff]
    %v51 = vld [vmem:[#allocation6 + $0x18] sm:$0x3f]
    %vm52 = vcmask 244736
    %v54 = vsel %vm52, %v44, 0
    %v57 = vsel %vm52, %v45, 0
    %v60 = vsel %vm52, %v46, 0
    %v63 = vsel %vm52, %v47, 0
    %vm65 = vcmask 1045504
    %v67 = vsel %vm65, %v51, 0
    %69 = vmatprep.subr.mxu0 0.0
    %70 = vmatpush1.msra.mxu0 %v48
    %71 = vmatprep.subr.mxu0 0.0
    %72 = vmatpush1.msra.mxu0 %v49
    %73 = vmatprep.subr.mxu0 0.0
    %74 = vmatpush1.msra.mxu0 %v50
    %75 = vmatprep.subr.mxu0 0.0
    %76 = vmatpush1.msra.mxu0 %v67
    %77 = vmatprep.subr.mxu0 0.0
    %78 = vmatpush1.msra.mxu0 0.0
    %79 = vmatprep.subr.mxu0 0.0
    %80 = vmatpush1.msra.mxu0 0.0
    %81 = vmatprep.subr.mxu0 0.0
    %82 = vmatpush1.msra.mxu0 0.0
    %83 = vmatprep.subr.mxu0 0.0
    %84 = vmatpush1.msra.mxu0 0.0
    %85 = vmatprep.subr.mxu0 0.0
    %86 = vmatpush1.msra.mxu0 0.0
    %87 = vmatprep.subr.mxu0 0.0
    %88 = vmatpush1.msra.mxu0 0.0
    %89 = vmatprep.subr.mxu0 0.0
    %90 = vmatpush1.msra.mxu0 0.0
    %91 = vmatprep.subr.mxu0 0.0
    %92 = vmatpush1.msra.mxu0 0.0
    %93 = vmatprep.subr.mxu0 0.0
    %94 = vmatpush1.msra.mxu0 0.0
    %95 = vmatprep.subr.mxu0 0.0
    %96 = vmatpush1.msra.mxu0 0.0
    %97 = vmatprep.subr.mxu0 0.0
    %98 = vmatpush1.msra.mxu0 0.0
    %99 = vmatprep.subr.mxu0 0.0
    %100 = vmatpush1.msra.mxu0 0.0
    %101 = vmatprep.subr.mxu0 0.0
    %102 = vmatpush1.msra.mxu0 0.0
    %103 = vmatprep.subr.mxu0 0.0
    %104 = vmatpush1.msra.mxu0 0.0
    %105 = vmatprep.subr.mxu0 0.0
    %106 = vmatpush1.msra.mxu0 0.0
    %107 = vmatprep.subr.mxu0 0.0
    %108 = vmatpush1.msra.mxu0 0.0
    %109 = vmatprep.subr.mxu0 0.0
    %110 = vmatpush1.msra.mxu0 0.0
    %111 = vmatprep.subr.mxu0 0.0
    %112 = vmatpush1.msra.mxu0 0.0
    %113 = vmatprep.subr.mxu0 0.0
    %114 = vmatpush1.msra.mxu0 0.0
    %115 = vmatprep.subr.mxu0 0.0
    %116 = vmatpush1.msra.mxu0 0.0
    %117 = vmatprep.subr.mxu0 0.0
    %118 = vmatpush1.msra.mxu0 0.0
    %119 = vmatprep.subr.mxu0 0.0
    %120 = vmatpush1.msra.mxu0 0.0
    %121 = vmatprep.subr.mxu0 0.0
    %122 = vmatpush1.msra.mxu0 0.0
    %123 = vmatprep.subr.mxu0 0.0
    %124 = vmatpush1.msra.mxu0 0.0
    %125 = vmatprep.subr.mxu0 0.0
    %126 = vmatpush1.msra.mxu0 0.0
    %127 = vmatprep.subr.mxu0 0.0
    %128 = vmatpush1.msra.mxu0 0.0
    %129 = vmatprep.subr.mxu0 0.0
    %130 = vmatpush1.msra.mxu0 0.0
    %131 = vmatprep.subr.mxu0 0.0
    %132 = vmatpush1.msra.mxu0 0.0
    %133 = vmatprep.mubr.f32.mxu0 0.0
    %134 = vmatmul.mubr.f32.gmra.mrb[0].mxu0 %v54
    %v135 = vpop.f32.mrb[0].mxu0
    %v136 = vadd.f32 0.0, %v135
    %v137 = vpop.f32.mrb[0].mxu0
    %138 = vmatprep.mubr.f32.mxu0 0.0
    %139 = vmatmul.mubr.f32.gmra.mrb[0].mxu0 %v57
    %v140 = vpop.f32.mrb[0].mxu0
    %v141 = vadd.f32 0.0, %v140
    %v142 = vpop.f32.mrb[0].mxu0
    %143 = vmatprep.mubr.f32.mxu0 0.0
    %144 = vmatmul.mubr.f32.gmra.mrb[0].mxu0 %v60
    %v145 = vpop.f32.mrb[0].mxu0
    %v146 = vadd.f32 0.0, %v145
    %v147 = vpop.f32.mrb[0].mxu0
    %148 = vmatprep.mubr.f32.mxu0 0.0
    %149 = vmatmul.mubr.f32.gmra.mrb[0].mxu0 %v63
    %v150 = vpop.f32.mrb[0].mxu0
    %v151 = vadd.f32 0.0, %v150
    %v152 = vpop.f32.mrb[0].mxu0
    %153 = vdwg.mxu0
    %154 = vst [vmem:[#allocation8] sm:$0xff] %v136
    %155 = vst [vmem:[#allocation8 + $0x8] sm:$0xff] %v141
    %156 = vst [vmem:[#allocation8 + $0x10] sm:$0xff] %v146
    %157 = vst [vmem:[#allocation8 + $0x18] sm:$0xff] %v151
    // Predicated region
    $region22: #{tpu_custom_call.1} parent=1 // pred_check
      _
    $region23: #{tpu_custom_call.1} parent=1 // pred_check_branch
      %159 = sbr.rel (0) target = $region25
    $region24: #{tpu_custom_call.1} parent=1 // pred_region
      %s161 = ssub.s32 512, 512
      %162 = vsyncadd [#allocation5], %s161
      %s163 = sshll.u32 [#allocation8], 4
      %s164 = int_to_ptr.vmem [resolvable:$true] %s163
      %169 = dma.vmem_to_hbm [thread:$0]  %s164, 512, %s3, [#allocation5], 128, 128, 8
    $region25: #{tpu_custom_call.1} parent=1 // pred_fallthru
      _
    // Predicated region
    $region26: #{tpu_custom_call.1} parent=1 // pred_check
      _
    $region27: #{tpu_custom_call.1} parent=1 // pred_check_branch
      %171 = sbr.rel (0) target = $region29
    $region28: #{tpu_custom_call.1} parent=1 // pred_region
      %172 = dma.done [#allocation5], 512
    $region29: #{tpu_custom_call.1} parent=1 // pred_fallthru
      _
    %173 = vsyncpa [#allocation4], 1
    %174 = vsyncpa [#allocation7], 1
    %175 = vsyncpa [#allocation5], 1

// kernel: tpu_custom_call.1
$region0: #{tpu_custom_call.1}
  #allocation0 [shape = 'u32[]', space=smem, size = 0x4, offset = 0x4, fixed_abs, tag = 'smem constant byte address 0x4 - core index']
  #allocation1 [shape = 'u32[144,128]{1,0:T(1,128)}', space=vmem, size = 0x12000, scoped, tag = 'internal scratch']
  #allocation2 [shape = 's32[1]{0:T(128)S(6)}', space=smem, size = 0x200, scoped, tag = 'scoped memory for tpu_custom_call.1']
  %s0 = inlined_call_operand.<no memory space> [shape: s32[1], index: 0, kind: input, shape index: {}]
  %s1 = inlined_call_operand.hbm [shape: f32[32,30], index: 1, kind: input, shape index: {}]
  %s2 = inlined_call_operand.hbm [shape: f32[30,128], index: 2, kind: input, shape index: {}]
  %s3 = inlined_call_operand.hbm [shape: f32[32,128], index: 3, kind: output, shape index: {}]
  %s4 = sld [smem:[#allocation0]]
  $region30: #{tpu_custom_call.1} parent=0
    _
  %s6 = ssub.s32 1, %s4
  %s7 = scalar_select 0, %s6, %s4
  %8 = sst [smem:[#allocation2]] %s0
  $region1: #{tpu_custom_call.1} parent=0
    #allocation3 [shape = 'u8[16384]{0}', space=vmem, size = 0x4000, scoped, tag = 'input window, operand 1, single buffered']
    #allocation4 [shape = 's32[1]{0}', space=sflag, size = 0x4, scoped, tag = 'scoped memory for tpu_custom_call.1']
    #allocation5 [shape = 's32[1]{0}', space=sflag, size = 0x4, scoped, tag = 'scoped memory for tpu_custom_call.1']
    #allocation6 [shape = 'u8[16384]{0}', space=vmem, size = 0x4000, scoped, tag = 'input window, operand 2, single buffered']
    #allocation7 [shape = 's32[1]{0}', space=sflag, size = 0x4, scoped, tag = 'scoped memory for tpu_custom_call.1']
    #allocation8 [shape = 'u8[16384]{0}', space=vmem, size = 0x4000, scoped, tag = 'output window, operand 0, single buffered']
    %9 = vsyncpa [#allocation4], 0
    %10 = vsyncpa [#allocation7], 0
    %11 = vsyncpa [#allocation5], 0
    // Predicated region
    $region2: #{tpu_custom_call.1} parent=1 // pred_check
      _
    $region3: #{tpu_custom_call.1} parent=1 // pred_check_branch
      %13 = sbr.rel (0) target = $region5
    $region4: #{tpu_custom_call.1} parent=1 // pred_region
      _
    $region5: #{tpu_custom_call.1} parent=1 // pred_fallthru
      _
    // Predicated region
    $region6: #{tpu_custom_call.1} parent=1 // pred_check
      _
    $region7: #{tpu_custom_call.1} parent=1 // pred_check_branch
      %15 = sbr.rel (0) target = $region9
    $region8: #{tpu_custom_call.1} parent=1 // pred_region
      %s17 = ssub.s32 512, 512
      %18 = vsyncadd [#allocation4], %s17
      %s19 = sshll.u32 [#allocation3], 4
      %s20 = int_to_ptr.vmem [resolvable:$true] %s19
      %25 = dma.hbm_to_vmem [thread:$0]  %s1, 512, %s20, [#allocation4], 128, 128, 8
    $region9: #{tpu_custom_call.1} parent=1 // pred_fallthru
      _
    // Predicated region
    $region10: #{tpu_custom_call.1} parent=1 // pred_check
      _
    $region11: #{tpu_custom_call.1} parent=1 // pred_check_branch
      %27 = sbr.rel (0) target = $region13
    $region12: #{tpu_custom_call.1} parent=1 // pred_region
      %s29 = ssub.s32 512, 512
      %30 = vsyncadd [#allocation7], %s29
      %s31 = sshll.u32 [#allocation6], 4
      %s32 = int_to_ptr.vmem [resolvable:$true] %s31
      %37 = dma.hbm_to_vmem [thread:$0]  %s2, 512, %s32, [#allocation7], 128, 128, 8
    $region13: #{tpu_custom_call.1} parent=1 // pred_fallthru
      _
    // Predicated region
    $region14: #{tpu_custom_call.1} parent=1 // pred_check
      _
    $region15: #{tpu_custom_call.1} parent=1 // pred_check_branch
      %39 = sbr.rel (0) target = $region17
    $region16: #{tpu_custom_call.1} parent=1 // pred_region
      %40 = dma.done [#allocation4], 512
    $region17: #{tpu_custom_call.1} parent=1 // pred_fallthru
      _
    // Predicated region
    $region18: #{tpu_custom_call.1} parent=1 // pred_check
      _
    $region19: #{tpu_custom_call.1} parent=1 // pred_check_branch
      %42 = sbr.rel (0) target = $region21
    $region20: #{tpu_custom_call.1} parent=1 // pred_region
      %43 = dma.done [#allocation7], 512
    $region21: #{tpu_custom_call.1} parent=1 // pred_fallthru
      _
    %v44 = vld [vmem:[#allocation3] sm:$0xff]
    %v45 = vld [vmem:[#allocation3 + $0x8] sm:$0xff]
    %v46 = vld [vmem:[#allocation3 + $0x10] sm:$0xff]
    %v47 = vld [vmem:[#allocation3 + $0x18] sm:$0xff]
    %v48 = vld [vmem:[#allocation6] sm:$0xff]
    %v49 = vld [vmem:[#allocation6 + $0x8] sm:$0xff]
    %v50 = vld [vmem:[#allocation6 + $0x10] sm:$0xff]
    %v51 = vld [vmem:[#allocation6 + $0x18] sm:$0x3f]
    %vm52 = vcmask 244736
    %v54 = vsel %vm52, %v44, 0
    %v57 = vsel %vm52, %v45, 0
    %v60 = vsel %vm52, %v46, 0
    %v63 = vsel %vm52, %v47, 0
    %vm65 = vcmask 1045504
    %v67 = vsel %vm65, %v51, 0
    %69 = vmatprep.subr.mxu0 0.0
    %70 = vmatpush1.msra.mxu0 %v48
    %71 = vmatprep.subr.mxu0 0.0
    %72 = vmatpush1.msra.mxu0 %v49
    %73 = vmatprep.subr.mxu0 0.0
    %74 = vmatpush1.msra.mxu0 %v50
    %75 = vmatprep.subr.mxu0 0.0
    %76 = vmatpush1.msra.mxu0 %v67
    %77 = vmatprep.subr.mxu0 0.0
    %78 = vmatpush1.msra.mxu0 0.0
    %79 = vmatprep.subr.mxu0 0.0
    %80 = vmatpush1.msra.mxu0 0.0
    %81 = vmatprep.subr.mxu0 0.0
    %82 = vmatpush1.msra.mxu0 0.0
    %83 = vmatprep.subr.mxu0 0.0
    %84 = vmatpush1.msra.mxu0 0.0
    %85 = vmatprep.subr.mxu0 0.0
    %86 = vmatpush1.msra.mxu0 0.0
    %87 = vmatprep.subr.mxu0 0.0
    %88 = vmatpush1.msra.mxu0 0.0
    %89 = vmatprep.subr.mxu0 0.0
    %90 = vmatpush1.msra.mxu0 0.0
    %91 = vmatprep.subr.mxu0 0.0
    %92 = vmatpush1.msra.mxu0 0.0
    %93 = vmatprep.subr.mxu0 0.0
    %94 = vmatpush1.msra.mxu0 0.0
    %95 = vmatprep.subr.mxu0 0.0
    %96 = vmatpush1.msra.mxu0 0.0
    %97 = vmatprep.subr.mxu0 0.0
    %98 = vmatpush1.msra.mxu0 0.0
    %99 = vmatprep.subr.mxu0 0.0
    %100 = vmatpush1.msra.mxu0 0.0
    %101 = vmatprep.subr.mxu0 0.0
    %102 = vmatpush1.msra.mxu0 0.0
    %103 = vmatprep.subr.mxu0 0.0
    %104 = vmatpush1.msra.mxu0 0.0
    %105 = vmatprep.subr.mxu0 0.0
    %106 = vmatpush1.msra.mxu0 0.0
    %107 = vmatprep.subr.mxu0 0.0
    %108 = vmatpush1.msra.mxu0 0.0
    %109 = vmatprep.subr.mxu0 0.0
    %110 = vmatpush1.msra.mxu0 0.0
    %111 = vmatprep.subr.mxu0 0.0
    %112 = vmatpush1.msra.mxu0 0.0
    %113 = vmatprep.subr.mxu0 0.0
    %114 = vmatpush1.msra.mxu0 0.0
    %115 = vmatprep.subr.mxu0 0.0
    %116 = vmatpush1.msra.mxu0 0.0
    %117 = vmatprep.subr.mxu0 0.0
    %118 = vmatpush1.msra.mxu0 0.0
    %119 = vmatprep.subr.mxu0 0.0
    %120 = vmatpush1.msra.mxu0 0.0
    %121 = vmatprep.subr.mxu0 0.0
    %122 = vmatpush1.msra.mxu0 0.0
    %123 = vmatprep.subr.mxu0 0.0
    %124 = vmatpush1.msra.mxu0 0.0
    %125 = vmatprep.subr.mxu0 0.0
    %126 = vmatpush1.msra.mxu0 0.0
    %127 = vmatprep.subr.mxu0 0.0
    %128 = vmatpush1.msra.mxu0 0.0
    %129 = vmatprep.subr.mxu0 0.0
    %130 = vmatpush1.msra.mxu0 0.0
    %131 = vmatprep.subr.mxu0 0.0
    %132 = vmatpush1.msra.mxu0 0.0
    %133 = vmatprep.mubr.f32.mxu0 0.0
    %134 = vmatmul.mubr.f32.gmra.mrb[0].mxu0 %v54
    %v135 = vpop.f32.mrb[0].mxu0
    %v136 = vadd.f32 0.0, %v135
    %v137 = vpop.f32.mrb[0].mxu0
    %138 = vmatprep.mubr.f32.mxu0 0.0
    %139 = vmatmul.mubr.f32.gmra.mrb[0].mxu0 %v57
    %v140 = vpop.f32.mrb[0].mxu0
    %v141 = vadd.f32 0.0, %v140
    %v142 = vpop.f32.mrb[0].mxu0
    %143 = vmatprep.mubr.f32.mxu0 0.0
    %144 = vmatmul.mubr.f32.gmra.mrb[0].mxu0 %v60
    %v145 = vpop.f32.mrb[0].mxu0
    %v146 = vadd.f32 0.0, %v145
    %v147 = vpop.f32.mrb[0].mxu0
    %148 = vmatprep.mubr.f32.mxu0 0.0
    %149 = vmatmul.mubr.f32.gmra.mrb[0].mxu0 %v63
    %v150 = vpop.f32.mrb[0].mxu0
    %v151 = vadd.f32 0.0, %v150
    %v152 = vpop.f32.mrb[0].mxu0
    %153 = vdwg.mxu0
    %154 = vst [vmem:[#allocation8] sm:$0xff] %v136
    %155 = vst [vmem:[#allocation8 + $0x8] sm:$0xff] %v141
    %156 = vst [vmem:[#allocation8 + $0x10] sm:$0xff] %v146
    %157 = vst [vmem:[#allocation8 + $0x18] sm:$0xff] %v151
    // Predicated region
    $region22: #{tpu_custom_call.1} parent=1 // pred_check
      _
    $region23: #{tpu_custom_call.1} parent=1 // pred_check_branch
      %159 = sbr.rel (0) target = $region25
    $region24: #{tpu_custom_call.1} parent=1 // pred_region
      %s161 = ssub.s32 512, 512
      %162 = vsyncadd [#allocation5], %s161
      %s163 = sshll.u32 [#allocation8], 4
      %s164 = int_to_ptr.vmem [resolvable:$true] %s163
      %169 = dma.vmem_to_hbm [thread:$0]  %s164, 512, %s3, [#allocation5], 128, 128, 8
    $region25: #{tpu_custom_call.1} parent=1 // pred_fallthru
      _
    // Predicated region
    $region26: #{tpu_custom_call.1} parent=1 // pred_check
      _
    $region27: #{tpu_custom_call.1} parent=1 // pred_check_branch
      %171 = sbr.rel (0) target = $region29
    $region28: #{tpu_custom_call.1} parent=1 // pred_region
      %172 = dma.done [#allocation5], 512
    $region29: #{tpu_custom_call.1} parent=1 // pred_fallthru
      _
    %173 = vsyncpa [#allocation4], 1
    %174 = vsyncpa [#allocation7], 1
    %175 = vsyncpa [#allocation5], 1

</llo_original>
